<compile_context>
chip_gen: v6e
topology: v6e:2x2x1
jax: 0.10.0
libtpu: 0.0.40
codegen_flags: <defaults>
</compile_context>

<pallas_src>
import jax
import jax.numpy as jnp
from jax.experimental import pallas as pl
from jax.experimental.pallas import tpu as pltpu


def _round_up(x, m):
    return ((x + m - 1) // m) * m


def _sublane(dtype):
    # Sublane packing multiple: 8 for 32-bit, 16 for bf16, 32 for int8/fp8.
    return max(8, 32 // jnp.dtype(dtype).itemsize)


def _vmem_budget_and_limit():
    """(tile-sizing budget, vmem_limit_bytes), sized per TPU generation."""
    try:
        cap = int(pltpu.get_tpu_info().vmem_capacity_bytes)
    except Exception:
        cap = 64 << 20  # assume the smallest (v7x-like) VMEM if the query fails
    if cap >= (128 << 20):        # v5e / v6e: 128 MiB physical per TensorCore
        return 64 << 20, 96 << 20
    return 24 << 20, 40 << 20     # v7x (64 MiB physical per TC) or unknown


def _pick_tm(num_nodes, in_dim, emb_dim, dtype, vmem_budget_bytes):
    """Largest sublane-multiple row tile whose pipeline fits the VMEM budget."""
    isz = jnp.dtype(dtype).itemsize
    sub = _sublane(dtype)
    in_lanes = _round_up(in_dim, 128)    # VMEM pads the last dim to 128 lanes
    emb_lanes = _round_up(emb_dim, 128)

    # Resident weight + bias (constant index_map; conservatively counted as
    # double-buffered).
    # TODO(synk): pipeline_mode=pl.Buffered(1) on the weight/bias specs would
    # halve this term once verified on the target JAX version.
    fixed = (2 * _round_up(in_dim, sub) * emb_lanes * isz
             + 2 * 8 * emb_lanes * 4)
    # Double-buffered x tile + y tile, per row (lane-padded widths).
    per_row = 2 * (in_lanes + emb_lanes) * isz

    tm = max(sub, (vmem_budget_bytes - fixed) // per_row)
    tm = min(tm, 2048)                          # diminishing returns past ~2K rows
    tm = min(tm, _round_up(num_nodes, sub))     # never bigger than the problem
    if num_nodes >= 1024:
        # Guarantee ~8 grid steps (>= 4 per v7x TensorCore) so the double-buffer
        # pipeline actually overlaps DMA with compute; per-step cost ~0.35 us.
        tm = min(tm, _round_up(-(-num_nodes // 8), sub))
    # TODO(synk): K-tiling fallback (f32 accumulator + 'arbitrary' K axis) for
    # very large in_dim, instead of letting tm collapse toward the minimum.
    return max(sub, (tm // sub) * sub)


def _linear_kernel(x_ref, w_ref, b_ref, o_ref):
    # x_ref: (tm, in_dim)       node-feature tile
    # w_ref: (in_dim, emb_dim)  pre-transposed weight, resident across the grid
    # b_ref: (1, emb_dim)       bias row (f32)
    # o_ref: (tm, emb_dim)      output tile (last dim == full array dim)
    acc = jnp.dot(x_ref[...], w_ref[...], preferred_element_type=jnp.float32)
    o_ref[...] = (acc + b_ref[...].astype(jnp.float32)).astype(o_ref.dtype)


def linear_node_encoder(x, weight, bias, *, tm=None):
    """y = x @ weight.T + bias  (PyTorch nn.Linear forward semantics).

    x:      [num_nodes, in_dim]   (f32 or bf16; bf16 recommended — mem-bound)
    weight: [emb_dim, in_dim]     (PyTorch layout)
    bias:   [emb_dim]
    returns [num_nodes, emb_dim]  in x.dtype
    """
    num_nodes, in_dim = x.shape
    emb_dim, w_in = weight.shape
    assert w_in == in_dim and bias.shape == (emb_dim,)

    # One-time param prep outside the per-step path: canonical (K, N) MXU layout
    # in the activation dtype; bias stays f32 for the in-kernel f32 bias add.
    w_t = jnp.asarray(weight, dtype=x.dtype).T            # (in_dim, emb_dim)
    b2 = jnp.asarray(bias, dtype=jnp.float32).reshape(1, emb_dim)

    vmem_budget, vmem_limit = _vmem_budget_and_limit()
    if tm is None:
        tm = _pick_tm(num_nodes, in_dim, emb_dim, x.dtype, vmem_budget)
    sub = _sublane(x.dtype)
    tm = max(sub, (tm // sub) * sub)

    isz = jnp.dtype(x.dtype).itemsize
    cost = pl.CostEstimate(
        flops=2 * num_nodes * in_dim * emb_dim,
        transcendentals=0,
        bytes_accessed=(num_nodes * in_dim + in_dim * emb_dim
                        + num_nodes * emb_dim) * isz + emb_dim * 4,
    )

    return pl.pallas_call(
        _linear_kernel,
        out_shape=jax.ShapeDtypeStruct((num_nodes, emb_dim), x.dtype),
        grid_spec=pltpu.PrefetchScalarGridSpec(
            num_scalar_prefetch=0,
            grid=(pl.cdiv(num_nodes, tm),),
            in_specs=[
                pl.BlockSpec((tm, in_dim), lambda i: (i, 0)),        # x tile
                pl.BlockSpec((in_dim, emb_dim), lambda i: (0, 0)),   # weight (resident)
                pl.BlockSpec((1, emb_dim), lambda i: (0, 0)),        # bias row
            ],
            out_specs=pl.BlockSpec((tm, emb_dim), lambda i: (i, 0)),
        ),
        compiler_params=pltpu.CompilerParams(
            dimension_semantics=("parallel",),
            vmem_limit_bytes=vmem_limit,
        ),
        cost_estimate=cost,
    )(x, w_t, b2)


if __name__ == "__main__":
    # Small module-consistent shapes: cfg.dataset.node_encoder_in_dim=32, emb_dim=64.
    key = jax.random.PRNGKey(0)
    kx, kw, kb = jax.random.split(key, 3)

    in_dim, emb_dim = 32, 64
    bound = 1.0 / float(in_dim) ** 0.5
    weight = jax.random.uniform(kw, (emb_dim, in_dim), jnp.float32, -bound, bound)
    bias = jax.random.uniform(kb, (emb_dim,), jnp.float32, -bound, bound)

    ok = True

    # f32 path: one lane-aligned and one ragged node count (exercises the
    # cdiv tail / overhang block masking).
    for num_nodes in (128, 100):
        x = jax.random.normal(kx, (num_nodes, in_dim), dtype=jnp.float32)
        y = linear_node_encoder(x, weight, bias)
        jax.block_until_ready(y)
        y_ref = x @ weight.T + bias
        ok &= y.shape == (num_nodes, emb_dim) and y.dtype == jnp.float32
        ok &= bool(jnp.allclose(y, y_ref, atol=1e-4, rtol=1e-4))

    # bf16 I/O path (recommended default: halves the dominant x-read / y-write
    # HBM traffic of this mem-bound kernel).
    x16 = jax.random.normal(kx, (256, in_dim), dtype=jnp.bfloat16)
    y16 = linear_node_encoder(x16, weight, bias)
    jax.block_until_ready(y16)
    y16_ref = x16.astype(jnp.float32) @ weight.T + bias
    ok &= y16.shape == (256, emb_dim) and y16.dtype == jnp.bfloat16
    ok &= bool(jnp.allclose(y16.astype(jnp.float32), y16_ref, atol=6e-2, rtol=6e-2))

    assert ok
    print("KERNEL_OK")
</pallas_src>

<mosaic_0001>
module attributes {stable_mosaic.version = 11 : i64} {
  func.func @_linear_kernel(%arg0: i32, %arg1: memref<128x32xf32, #tpu.memory_space<vmem>>, %arg2: memref<32x64xf32, #tpu.memory_space<vmem>>, %arg3: memref<1x64xf32, #tpu.memory_space<vmem>>, %arg4: memref<128x64xf32, #tpu.memory_space<vmem>>) attributes {dimension_semantics = [#tpu.dimension_semantics<parallel>], iteration_bounds = array<i64: 1>, scalar_prefetch = 0 : i64, scratch_operands = 0 : i64, tpu.core_type = #tpu.core_type<tc>, window_params = [{transform_indices = @transform_0, window_bounds = array<i64: 128, 32>}, {pipeline_mode = #tpu.pipeline_mode<synchronous>, transform_indices = @transform_1, window_bounds = array<i64: 32, 64>}, {pipeline_mode = #tpu.pipeline_mode<synchronous>, transform_indices = @transform_2, window_bounds = array<i64: 1, 64>}, {transform_indices = @transform_3, window_bounds = array<i64: 128, 64>}]} {
    %c0 = arith.constant 0 : index
    %c0_0 = arith.constant 0 : index
    %0 = vector.load %arg1[%c0, %c0_0] : memref<128x32xf32, #tpu.memory_space<vmem>>, vector<128x32xf32>
    %c0_1 = arith.constant 0 : index
    %c0_2 = arith.constant 0 : index
    %1 = vector.load %arg2[%c0_1, %c0_2] : memref<32x64xf32, #tpu.memory_space<vmem>>, vector<32x64xf32>
    %cst = arith.constant dense<0.000000e+00> : vector<128x64xf32>
    %2 = tpu.matmul %0, %1, %cst {dimension_numbers = #tpu.dot_dimension_numbers<[1], [0], [0], [1], [0, 0, 1, 1], [], []>} : vector<128x32xf32>, vector<32x64xf32>, vector<128x64xf32> -> vector<128x64xf32>
    %c0_3 = arith.constant 0 : index
    %c0_4 = arith.constant 0 : index
    %3 = vector.load %arg3[%c0_3, %c0_4] : memref<1x64xf32, #tpu.memory_space<vmem>>, vector<1x64xf32>
    %4 = vector.broadcast %3 : vector<1x64xf32> to vector<128x64xf32>
    %5 = arith.addf %2, %4 : vector<128x64xf32>
    %c0_5 = arith.constant 0 : index
    %c0_6 = arith.constant 0 : index
    %6 = vector.load %arg4[%c0_5, %c0_6] : memref<128x64xf32, #tpu.memory_space<vmem>>, vector<128x64xf32>
    tpu.vector_store %arg4[%c0_5, %c0_6], %5 {strides = array<i32>} : memref<128x64xf32, #tpu.memory_space<vmem>>, vector<128x64xf32>,
    return
  }
  func.func @transform_0(%arg0: i32) -> (i32, i32) {
    %c0_i32 = arith.constant 0 : i32
    %c0_i32_0 = arith.constant 0 : i32
    return %arg0, %c0_i32 : i32, i32
  }
  func.func @transform_1(%arg0: i32) -> (i32, i32) {
    %c0_i32 = arith.constant 0 : i32
    %c0_i32_0 = arith.constant 0 : i32
    %c0_i32_1 = arith.constant 0 : i32
    return %c0_i32, %c0_i32_0 : i32, i32
  }
  func.func @transform_2(%arg0: i32) -> (i32, i32) {
    %c0_i32 = arith.constant 0 : i32
    %c0_i32_0 = arith.constant 0 : i32
    %c0_i32_1 = arith.constant 0 : i32
    return %c0_i32, %c0_i32_0 : i32, i32
  }
  func.func @transform_3(%arg0: i32) -> (i32, i32) {
    %c0_i32 = arith.constant 0 : i32
    %c0_i32_0 = arith.constant 0 : i32
    return %arg0, %c0_i32 : i32, i32
  }
}

</mosaic_0001>

<llo_original>
// kernel: tpu_custom_call.1
$region0: #{tpu_custom_call.1}
  #allocation0 [shape = 'u32[]', space=smem, size = 0x4, offset = 0x4, fixed_abs, tag = 'smem constant byte address 0x4 - core index']
  #allocation1 [shape = 'u32[144,128]{1,0:T(1,128)}', space=vmem, size = 0x12000, scoped, tag = 'internal scratch']
  %s0 = inlined_call_operand.vmem [shape: f32[128,32], index: 0, kind: input, shape index: {}]
  %s1 = inlined_call_operand.vmem [shape: f32[32,64], index: 1, kind: input, shape index: {}]
  %s2 = inlined_call_operand.vmem [shape: f32[1,64], index: 2, kind: input, shape index: {}]
  %s3 = inlined_call_operand.vmem [shape: f32[128,64], index: 3, kind: output, shape index: {}]
  %s4 = sld [smem:[#allocation0]]
  $region22: #{tpu_custom_call.1} parent=0
    _
  %s6 = ssub.s32 1, %s4
  %s7 = scalar_select 0, %s6, %s4
  // Predicated region
  $region2: #{tpu_custom_call.1} parent=0 // pred_check
    _
  $region3: #{tpu_custom_call.1} parent=0 // pred_check_branch
    %9 = sbr.rel (0) target = $region5
  $region4: #{tpu_custom_call.1} parent=0 // pred_region
    _
  $region5: #{tpu_custom_call.1} parent=0 // pred_fallthru
    _
  // Predicated region
  $region6: #{tpu_custom_call.1} parent=0 // pred_check
    _
  $region7: #{tpu_custom_call.1} parent=0 // pred_check_branch
    %11 = sbr.rel (0) target = $region9
  $region8: #{tpu_custom_call.1} parent=0 // pred_region
    _
  $region9: #{tpu_custom_call.1} parent=0 // pred_fallthru
    _
  // Predicated region
  $region10: #{tpu_custom_call.1} parent=0 // pred_check
    _
  $region11: #{tpu_custom_call.1} parent=0 // pred_check_branch
    %13 = sbr.rel (0) target = $region13
  $region12: #{tpu_custom_call.1} parent=0 // pred_region
    _
  $region13: #{tpu_custom_call.1} parent=0 // pred_fallthru
    _
  %v14 = vld [vmem:[%s0] sm:$0xff]
  %v15 = vld [vmem:[%s0 + $0x8] sm:$0xff]
  %v16 = vld [vmem:[%s0 + $0x10] sm:$0xff]
  %v17 = vld [vmem:[%s0 + $0x18] sm:$0xff]
  %v18 = vld [vmem:[%s0 + $0x20] sm:$0xff]
  %v19 = vld [vmem:[%s0 + $0x28] sm:$0xff]
  %v20 = vld [vmem:[%s0 + $0x30] sm:$0xff]
  %v21 = vld [vmem:[%s0 + $0x38] sm:$0xff]
  %v22 = vld [vmem:[%s0 + $0x40] sm:$0xff]
  %v23 = vld [vmem:[%s0 + $0x48] sm:$0xff]
  %v24 = vld [vmem:[%s0 + $0x50] sm:$0xff]
  %v25 = vld [vmem:[%s0 + $0x58] sm:$0xff]
  %v26 = vld [vmem:[%s0 + $0x60] sm:$0xff]
  %v27 = vld [vmem:[%s0 + $0x68] sm:$0xff]
  %v28 = vld [vmem:[%s0 + $0x70] sm:$0xff]
  %v29 = vld [vmem:[%s0 + $0x78] sm:$0xff]
  %v30 = vld [vmem:[%s1] sm:$0xff]
  %v31 = vld [vmem:[%s1 + $0x8] sm:$0xff]
  %v32 = vld [vmem:[%s1 + $0x10] sm:$0xff]
  %v33 = vld [vmem:[%s1 + $0x18] sm:$0xff]
  %v34 = vld [vmem:[%s2] sm:$0x1]
  %v36 = vlaneseq
  %v37 = vshrl.u32 %v36, 7
  %v38 = vsub.s32 0, %v37
  %v39 = vrot.slane %v34, %v38
  %vm41 = vcmask 261120
  %v43 = vsel %vm41, %v14, 0
  %v46 = vsel %vm41, %v15, 0
  %v49 = vsel %vm41, %v16, 0
  %v52 = vsel %vm41, %v17, 0
  %v55 = vsel %vm41, %v18, 0
  %v58 = vsel %vm41, %v19, 0
  %v61 = vsel %vm41, %v20, 0
  %v64 = vsel %vm41, %v21, 0
  %v67 = vsel %vm41, %v22, 0
  %v70 = vsel %vm41, %v23, 0
  %v73 = vsel %vm41, %v24, 0
  %v76 = vsel %vm41, %v25, 0
  %v79 = vsel %vm41, %v26, 0
  %v82 = vsel %vm41, %v27, 0
  %v85 = vsel %vm41, %v28, 0
  %v88 = vsel %vm41, %v29, 0
  %90 = vmatprep.subr.mxu0 0.0
  %91 = vmatpush1.msra.mxu0 0.0
  %92 = vmatprep.subr.mxu0 0.0
  %93 = vmatpush1.msra.mxu0 0.0
  %94 = vmatprep.subr.mxu0 0.0
  %95 = vmatpush1.msra.mxu0 0.0
  %96 = vmatprep.subr.mxu0 0.0
  %97 = vmatpush1.msra.mxu0 0.0
  %98 = vmatprep.subr.mxu0 0.0
  %99 = vmatpush1.msra.mxu0 0.0
  %100 = vmatprep.subr.mxu0 0.0
  %101 = vmatpush1.msra.mxu0 0.0
  %102 = vmatprep.subr.mxu0 0.0
  %103 = vmatpush1.msra.mxu0 0.0
  %104 = vmatprep.subr.mxu0 0.0
  %105 = vmatpush1.msra.mxu0 0.0
  %106 = vmatprep.subr.mxu0 0.0
  %107 = vmatpush1.msra.mxu0 0.0
  %108 = vmatprep.subr.mxu0 0.0
  %109 = vmatpush1.msra.mxu0 0.0
  %110 = vmatprep.subr.mxu0 0.0
  %111 = vmatpush1.msra.mxu0 0.0
  %112 = vmatprep.subr.mxu0 0.0
  %113 = vmatpush1.msra.mxu0 0.0
  %114 = vmatprep.subr.mxu0 0.0
  %115 = vmatpush1.msra.mxu0 %v33
  %116 = vmatprep.subr.mxu0 0.0
  %117 = vmatpush1.msra.mxu0 %v32
  %118 = vmatprep.subr.mxu0 0.0
  %119 = vmatpush1.msra.mxu0 %v31
  %120 = vmatprep.subr.mxu0 0.0
  %121 = vmatpush1.msra.mxu0 %v30
  %122 = vmatprep.subr.mxu0 0.0
  %123 = vmatpush2.msra.mxu0 0.0
  %124 = vmatprep.subr.mxu0 0.0
  %125 = vmatpush2.msra.mxu0 0.0
  %126 = vmatprep.subr.mxu0 0.0
  %127 = vmatpush2.msra.mxu0 0.0
  %128 = vmatprep.subr.mxu0 0.0
  %129 = vmatpush2.msra.mxu0 0.0
  %130 = vmatprep.subr.mxu0 0.0
  %131 = vmatpush2.msra.mxu0 0.0
  %132 = vmatprep.subr.mxu0 0.0
  %133 = vmatpush2.msra.mxu0 0.0
  %134 = vmatprep.subr.mxu0 0.0
  %135 = vmatpush2.msra.mxu0 0.0
  %136 = vmatprep.subr.mxu0 0.0
  %137 = vmatpush2.msra.mxu0 0.0
  %138 = vmatprep.subr.mxu0 0.0
  %139 = vmatpush2.msra.mxu0 0.0
  %140 = vmatprep.subr.mxu0 0.0
  %141 = vmatpush2.msra.mxu0 0.0
  %142 = vmatprep.subr.mxu0 0.0
  %143 = vmatpush2.msra.mxu0 0.0
  %144 = vmatprep.subr.mxu0 0.0
  %145 = vmatpush2.msra.mxu0 0.0
  %146 = vmatprep.subr.mxu0 0.0
  %147 = vmatpush2.msra.mxu0 0.0
  %148 = vmatprep.subr.mxu0 0.0
  %149 = vmatpush2.msra.mxu0 0.0
  %150 = vmatprep.subr.mxu0 0.0
  %151 = vmatpush2.msra.mxu0 0.0
  %152 = vmatprep.subr.mxu0 0.0
  %153 = vmatpush2.msra.mxu0 0.0
  %154 = vmatprep.mubr.f32.mxu0 0.0
  %155 = vmatmul.mubr.f32.gmra.mxu0 %v43
  %v156 = vpop.f32.mrf.mxu0
  %v157 = vadd.f32 %v39, %v156
  %v158 = vpop.f32.mrf.mxu0
  %159 = vmatprep.mubr.f32.mxu0 0.0
  %160 = vmatmul.mubr.f32.gmra.mxu0 %v46
  %v161 = vpop.f32.mrf.mxu0
  %v162 = vadd.f32 %v39, %v161
  %v163 = vpop.f32.mrf.mxu0
  %164 = vmatprep.mubr.f32.mxu0 0.0
  %165 = vmatmul.mubr.f32.gmra.mxu0 %v49
  %v166 = vpop.f32.mrf.mxu0
  %v167 = vadd.f32 %v39, %v166
  %v168 = vpop.f32.mrf.mxu0
  %169 = vmatprep.mubr.f32.mxu0 0.0
  %170 = vmatmul.mubr.f32.gmra.mxu0 %v52
  %v171 = vpop.f32.mrf.mxu0
  %v172 = vadd.f32 %v39, %v171
  %v173 = vpop.f32.mrf.mxu0
  %174 = vmatprep.mubr.f32.mxu0 0.0
  %175 = vmatmul.mubr.f32.gmra.mxu0 %v55
  %v176 = vpop.f32.mrf.mxu0
  %v177 = vadd.f32 %v39, %v176
  %v178 = vpop.f32.mrf.mxu0
  %179 = vmatprep.mubr.f32.mxu0 0.0
  %180 = vmatmul.mubr.f32.gmra.mxu0 %v58
  %v181 = vpop.f32.mrf.mxu0
  %v182 = vadd.f32 %v39, %v181
  %v183 = vpop.f32.mrf.mxu0
  %184 = vmatprep.mubr.f32.mxu0 0.0
  %185 = vmatmul.mubr.f32.gmra.mxu0 %v61
  %v186 = vpop.f32.mrf.mxu0
  %v187 = vadd.f32 %v39, %v186
  %v188 = vpop.f32.mrf.mxu0
  %189 = vmatprep.mubr.f32.mxu0 0.0
  %190 = vmatmul.mubr.f32.gmra.mxu0 %v64
  %v191 = vpop.f32.mrf.mxu0
  %v192 = vadd.f32 %v39, %v191
  %v193 = vpop.f32.mrf.mxu0
  %194 = vmatprep.mubr.f32.mxu0 0.0
  %195 = vmatmul.mubr.f32.gmra.mxu0 %v67
  %v196 = vpop.f32.mrf.mxu0
  %v197 = vadd.f32 %v39, %v196
  %v198 = vpop.f32.mrf.mxu0
  %199 = vmatprep.mubr.f32.mxu0 0.0
  %200 = vmatmul.mubr.f32.gmra.mxu0 %v70
  %v201 = vpop.f32.mrf.mxu0
  %v202 = vadd.f32 %v39, %v201
  %v203 = vpop.f32.mrf.mxu0
  %204 = vmatprep.mubr.f32.mxu0 0.0
  %205 = vmatmul.mubr.f32.gmra.mxu0 %v73
  %v206 = vpop.f32.mrf.mxu0
  %v207 = vadd.f32 %v39, %v206
  %v208 = vpop.f32.mrf.mxu0
  %209 = vmatprep.mubr.f32.mxu0 0.0
  %210 = vmatmul.mubr.f32.gmra.mxu0 %v76
  %v211 = vpop.f32.mrf.mxu0
  %v212 = vadd.f32 %v39, %v211
  %v213 = vpop.f32.mrf.mxu0
  %214 = vmatprep.mubr.f32.mxu0 0.0
  %215 = vmatmul.mubr.f32.gmra.mxu0 %v79
  %v216 = vpop.f32.mrf.mxu0
  %v217 = vadd.f32 %v39, %v216
  %v218 = vpop.f32.mrf.mxu0
  %219 = vmatprep.mubr.f32.mxu0 0.0
  %220 = vmatmul.mubr.f32.gmra.mxu0 %v82
  %v221 = vpop.f32.mrf.mxu0
  %v222 = vadd.f32 %v39, %v221
  %v223 = vpop.f32.mrf.mxu0
  %224 = vmatprep.mubr.f32.mxu0 0.0
  %225 = vmatmul.mubr.f32.gmra.mxu0 %v85
  %v226 = vpop.f32.mrf.mxu0
  %v227 = vadd.f32 %v39, %v226
  %v228 = vpop.f32.mrf.mxu0
  %229 = vmatprep.mubr.f32.mxu0 0.0
  %230 = vmatmul.mubr.f32.gmra.mxu0 %v88
  %v231 = vpop.f32.mrf.mxu0
  %v232 = vadd.f32 %v39, %v231
  %v233 = vpop.f32.mrf.mxu0
  %234 = vdwg.mxu0
  %vm235 = vcmask 523264
  %236 = vst.msk [vmem:[%s3] sm:$0xff] %vm235, %v157
  %237 = vst.msk [vmem:[%s3 + $0x8] sm:$0xff] %vm235, %v162
  %238 = vst.msk [vmem:[%s3 + $0x10] sm:$0xff] %vm235, %v167
  %239 = vst.msk [vmem:[%s3 + $0x18] sm:$0xff] %vm235, %v172
  %240 = vst.msk [vmem:[%s3 + $0x20] sm:$0xff] %vm235, %v177
  %241 = vst.msk [vmem:[%s3 + $0x28] sm:$0xff] %vm235, %v182
  %242 = vst.msk [vmem:[%s3 + $0x30] sm:$0xff] %vm235, %v187
  %243 = vst.msk [vmem:[%s3 + $0x38] sm:$0xff] %vm235, %v192
  %244 = vst.msk [vmem:[%s3 + $0x40] sm:$0xff] %vm235, %v197
  %245 = vst.msk [vmem:[%s3 + $0x48] sm:$0xff] %vm235, %v202
  %246 = vst.msk [vmem:[%s3 + $0x50] sm:$0xff] %vm235, %v207
  %247 = vst.msk [vmem:[%s3 + $0x58] sm:$0xff] %vm235, %v212
  %248 = vst.msk [vmem:[%s3 + $0x60] sm:$0xff] %vm235, %v217
  %249 = vst.msk [vmem:[%s3 + $0x68] sm:$0xff] %vm235, %v222
  %250 = vst.msk [vmem:[%s3 + $0x70] sm:$0xff] %vm235, %v227
  %251 = vst.msk [vmem:[%s3 + $0x78] sm:$0xff] %vm235, %v232
  // Predicated region
  $region14: #{tpu_custom_call.1} parent=0 // pred_check
    _
  $region15: #{tpu_custom_call.1} parent=0 // pred_check_branch
    %253 = sbr.rel (0) target = $region17
  $region16: #{tpu_custom_call.1} parent=0 // pred_region
    _
  $region17: #{tpu_custom_call.1} parent=0 // pred_fallthru
    _
  // Predicated region
  $region18: #{tpu_custom_call.1} parent=0 // pred_check
    _
  $region19: #{tpu_custom_call.1} parent=0 // pred_check_branch
    %255 = sbr.rel (0) target = $region21
  $region20: #{tpu_custom_call.1} parent=0 // pred_region
    _
  $region21: #{tpu_custom_call.1} parent=0 // pred_fallthru
    _

</llo_original>
